<compile_context>
chip_gen: v7x
topology: tpu7x:2x2x1
jax: 0.10.0
libtpu: 0.0.40
codegen_flags: <defaults>
</compile_context>

<pallas_src>
import functools

import jax
import jax.numpy as jnp
from jax import lax
from jax.experimental import pallas as pl
from jax.experimental.pallas import tpu as pltpu


def _chan_ln_kernel(g_ref, x_ref, o_ref, *, eps, stable):
    # x_ref: (tB, C, tS) or (tB, C, tS1, S2); reduction is always over axis 1.
    x = x_ref[...].astype(jnp.float32)
    if stable:
        # Exact divide (matches torch's x / x.amax(dim=1).detach()); no approx
        # reciprocal here since this feeds the statistics.
        x = x / jnp.max(x, axis=1, keepdims=True)

    inv_c = 1.0 / x.shape[1]
    mean = jnp.sum(x, axis=1, keepdims=True) * inv_c
    xc = x - mean
    # Two-pass (centered) biased variance: no catastrophic cancellation.
    var = jnp.sum(xc * xc, axis=1, keepdims=True) * inv_c
    inv_std = lax.rsqrt(var + eps)                 # EUP
    o_ref[...] = (xc * inv_std * g_ref[...]).astype(o_ref.dtype)


def _round_down(x, m):
    return (x // m) * m


def _largest_mult_of_128_divisor(s, cap=2048):
    """Largest multiple-of-128 divisor of s, capped (0 if none exists)."""
    best = 0
    t = 128
    while t <= min(cap, s):
        if s % t == 0:
            best = t
        t += 128
    return best


def _vmem_limit_bytes():
    """Per-generation scoped-VMEM budget (leave headroom below physical)."""
    vmem_cap = None
    try:
        info = pltpu.get_tpu_info()
        vmem_cap = int(getattr(info, "vmem_capacity_bytes"))
    except Exception:
        vmem_cap = None
    if vmem_cap is None:
        try:
            kind = jax.devices()[0].device_kind.lower()
        except Exception:
            kind = ""
        # v7x: 64 MiB per TensorCore; v5e/v6e: 128 MiB.
        vmem_cap = 64 * 1024 * 1024 if "v7" in kind else 128 * 1024 * 1024
    return min((vmem_cap * 3) // 4, 96 * 1024 * 1024)


def chan_layer_norm(x, g, *, stable=False):
    """x: (B, C, *spatial), g: (1, C, 1, 1, 1). Returns same shape/dtype as x."""
    orig_shape = x.shape
    B, C = int(x.shape[0]), int(x.shape[1])
    S = 1
    for d in x.shape[2:]:
        S *= int(d)
    eps = 1e-5 if x.dtype == jnp.float32 else 1e-3
    itemsize = x.dtype.itemsize

    vmem_limit = _vmem_limit_bytes()
    # One block <= ~1/8 of the scoped budget (2x in + 2x out double buffers
    # plus f32 temporaries), capped at ~1M elements (~4 MiB f32).
    target_elems = min(1 << 20, max(64 * 1024, (vmem_limit // 8) // itemsize))

    g32 = g.reshape(1, C).astype(jnp.float32)  # keep the gain in f32 end-to-end

    kernel = functools.partial(_chan_ln_kernel, eps=eps, stable=stable)
    compiler_params = pltpu.CompilerParams(
        dimension_semantics=("parallel", "parallel"),
        vmem_limit_bytes=vmem_limit,
    )
    cost = pl.CostEstimate(
        flops=8 * B * C * S,
        transcendentals=B * S,
        bytes_accessed=2 * B * C * S * itemsize + C * 4,
    )

    s2 = _largest_mult_of_128_divisor(S)
    if s2:
        # Lane-dense 4-D layout (free reshape): (B, C, S1, S2), S2 % 128 == 0.
        s1 = S // s2
        row_elems = C * s1 * s2
        if row_elems <= target_elems:
            ts1 = s1
            tb = min(B, max(1, target_elems // row_elems))
        else:
            tb = 1
            ts1 = max(1, target_elems // (C * s2))
            if ts1 >= s1:
                ts1 = s1
            elif ts1 >= 8:
                ts1 = _round_down(ts1, 8)     # (8, 128) block constraint
            else:
                ts1 = min(8, s1)
        grid = (pl.cdiv(B, tb), pl.cdiv(s1, ts1))
        x_r = x.reshape(B, C, s1, s2)
        g_r = g32.reshape(1, C, 1, 1)
        in_specs = [
            pl.BlockSpec((1, C, 1, 1), lambda i, j: (0, 0, 0, 0)),       # g
            pl.BlockSpec((tb, C, ts1, s2), lambda i, j: (i, 0, j, 0)),   # x
        ]
        out_specs = pl.BlockSpec((tb, C, ts1, s2), lambda i, j: (i, 0, j, 0))
        out_shape = jax.ShapeDtypeStruct((B, C, s1, s2), x.dtype)
    else:
        # Fallback: S has no multiple-of-128 divisor.  Fixed multiple-of-128
        # tile, ragged last tile masked by Pallas.
        if S <= 128:
            ts = S
        else:
            ts = min(_round_down(max(128, target_elems // C), 128), 8192)
            ts = max(128, ts)
            if ts >= S:
                ts = _round_down(S, 128)
        if ts == S and C * S <= target_elems:
            tb = min(B, max(1, target_elems // (C * S)))
        else:
            tb = 1
        grid = (pl.cdiv(B, tb), pl.cdiv(S, ts))
        x_r = x.reshape(B, C, S)
        g_r = g32.reshape(1, C, 1)
        in_specs = [
            pl.BlockSpec((1, C, 1), lambda i, j: (0, 0, 0)),      # g
            pl.BlockSpec((tb, C, ts), lambda i, j: (i, 0, j)),    # x
        ]
        out_specs = pl.BlockSpec((tb, C, ts), lambda i, j: (i, 0, j))
        out_shape = jax.ShapeDtypeStruct((B, C, S), x.dtype)

    out_r = pl.pallas_call(
        kernel,
        out_shape=out_shape,
        grid_spec=pltpu.PrefetchScalarGridSpec(
            num_scalar_prefetch=0,
            grid=grid,
            in_specs=in_specs,
            out_specs=out_specs,
        ),
        compiler_params=compiler_params,
        cost_estimate=cost,
    )(g_r, x_r)

    return out_r.reshape(orig_shape)


def _reference(x, g, *, stable=False):
    eps = 1e-5 if x.dtype == jnp.float32 else 1e-3
    xf = x.astype(jnp.float32)
    if stable:
        xf = xf / jnp.max(xf, axis=1, keepdims=True)
    mean = jnp.mean(xf, axis=1, keepdims=True)
    var = jnp.mean((xf - mean) ** 2, axis=1, keepdims=True)
    gf = g.astype(jnp.float32).reshape((1, x.shape[1]) + (1,) * (x.ndim - 2))
    return ((xf - mean) * lax.rsqrt(var + eps) * gf).astype(x.dtype)


if __name__ == "__main__":
    key = jax.random.PRNGKey(0)
    k1, k2 = jax.random.split(key)
    B, C, F, H, W = 2, 4, 4, 16, 16

    x = jax.random.normal(k1, (B, C, F, H, W), dtype=jnp.float32)
    g = jnp.ones((1, C, 1, 1, 1), dtype=jnp.float32)  # nn.Parameter(torch.ones(...))

    # Main path (lane-dense 4-D layout).
    out = jax.block_until_ready(chan_layer_norm(x, g, stable=False))
    ref = _reference(x, g, stable=False)
    assert out.shape == x.shape and out.dtype == x.dtype
    assert jnp.allclose(out, ref, atol=1e-5, rtol=1e-5), "mismatch (stable=False)"

    # stable=True path (exact divide by channel amax).
    x2 = jax.random.normal(k2, (B, C, F, H, W), dtype=jnp.float32) + 3.0
    out2 = jax.block_until_ready(chan_layer_norm(x2, g, stable=True))
    ref2 = _reference(x2, g, stable=True)
    assert jnp.allclose(out2, ref2, atol=1e-5, rtol=1e-5), "mismatch (stable=True)"

    # Ragged spatial size (no 128-divisor) exercises the masked fallback path.
    x3 = jax.random.normal(k1, (2, C, 1, 9, 20), dtype=jnp.float32)
    out3 = jax.block_until_ready(chan_layer_norm(x3, g, stable=False))
    ref3 = _reference(x3, g, stable=False)
    assert jnp.allclose(out3, ref3, atol=1e-5, rtol=1e-5), "mismatch (ragged S)"

    print("KERNEL_OK")
</pallas_src>

<mosaic_0001>
module attributes {stable_mosaic.version = 11 : i64} {
  func.func @_chan_ln_kernel(%arg0: i32, %arg1: i32, %arg2: memref<1x4x1x1xf32, #tpu.memory_space<vmem>>, %arg3: memref<2x4x1x1024xf32, #tpu.memory_space<vmem>>, %arg4: memref<2x4x1x1024xf32, #tpu.memory_space<vmem>>) attributes {dimension_semantics = [#tpu.dimension_semantics<parallel>, #tpu.dimension_semantics<parallel>], iteration_bounds = array<i64: 1, 1>, scalar_prefetch = 0 : i64, scratch_operands = 0 : i64, tpu.core_type = #tpu.core_type<tc>, window_params = [{pipeline_mode = #tpu.pipeline_mode<synchronous>, transform_indices = @transform_0, window_bounds = array<i64: 1, 4, 1, 1>}, {transform_indices = @transform_1, window_bounds = array<i64: 2, 4, 1, 1024>}, {transform_indices = @transform_2, window_bounds = array<i64: 2, 4, 1, 1024>}]} {
    %c0 = arith.constant 0 : index
    %c0_0 = arith.constant 0 : index
    %c0_1 = arith.constant 0 : index
    %c0_2 = arith.constant 0 : index
    %0 = vector.load %arg3[%c0, %c0_0, %c0_1, %c0_2] : memref<2x4x1x1024xf32, #tpu.memory_space<vmem>>, vector<2x4x1x1024xf32>
    %cst = arith.constant dense<0.000000e+00> : vector<2x1x1024xf32>
    %1 = vector.multi_reduction <add>, %0, %cst [1] : vector<2x4x1x1024xf32> to vector<2x1x1024xf32>
    %2 = vector.shape_cast %1 : vector<2x1x1024xf32> to vector<2x1x1x1024xf32>
    %cst_3 = arith.constant 2.500000e-01 : f32
    %3 = vector.broadcast %cst_3 : f32 to vector<2x1x1x1024xf32>
    %4 = arith.mulf %2, %3 : vector<2x1x1x1024xf32>
    %5 = vector.broadcast %4 : vector<2x1x1x1024xf32> to vector<2x4x1x1024xf32>
    %6 = arith.subf %0, %5 : vector<2x4x1x1024xf32>
    %7 = arith.mulf %6, %6 : vector<2x4x1x1024xf32>
    %cst_4 = arith.constant dense<0.000000e+00> : vector<2x1x1024xf32>
    %8 = vector.multi_reduction <add>, %7, %cst_4 [1] : vector<2x4x1x1024xf32> to vector<2x1x1024xf32>
    %9 = vector.shape_cast %8 : vector<2x1x1024xf32> to vector<2x1x1x1024xf32>
    %cst_5 = arith.constant 2.500000e-01 : f32
    %10 = vector.broadcast %cst_5 : f32 to vector<2x1x1x1024xf32>
    %11 = arith.mulf %9, %10 : vector<2x1x1x1024xf32>
    %cst_6 = arith.constant 9.99999974E-6 : f32
    %12 = vector.broadcast %cst_6 : f32 to vector<2x1x1x1024xf32>
    %13 = arith.addf %11, %12 : vector<2x1x1x1024xf32>
    %14 = math.rsqrt %13 : vector<2x1x1x1024xf32>
    %15 = vector.broadcast %14 : vector<2x1x1x1024xf32> to vector<2x4x1x1024xf32>
    %16 = arith.mulf %6, %15 : vector<2x4x1x1024xf32>
    %c0_7 = arith.constant 0 : index
    %c0_8 = arith.constant 0 : index
    %c0_9 = arith.constant 0 : index
    %c0_10 = arith.constant 0 : index
    %17 = vector.load %arg2[%c0_7, %c0_8, %c0_9, %c0_10] : memref<1x4x1x1xf32, #tpu.memory_space<vmem>>, vector<1x4x1x1xf32>
    %18 = vector.broadcast %17 : vector<1x4x1x1xf32> to vector<2x4x1x1024xf32>
    %19 = arith.mulf %16, %18 : vector<2x4x1x1024xf32>
    %c0_11 = arith.constant 0 : index
    %c0_12 = arith.constant 0 : index
    %c0_13 = arith.constant 0 : index
    %c0_14 = arith.constant 0 : index
    %20 = vector.load %arg4[%c0_11, %c0_12, %c0_13, %c0_14] : memref<2x4x1x1024xf32, #tpu.memory_space<vmem>>, vector<2x4x1x1024xf32>
    tpu.vector_store %arg4[%c0_11, %c0_12, %c0_13, %c0_14], %19 {strides = array<i32>} : memref<2x4x1x1024xf32, #tpu.memory_space<vmem>>, vector<2x4x1x1024xf32>,
    return
  }
  func.func @transform_0(%arg0: i32, %arg1: i32) -> (i32, i32, i32, i32) {
    %c0_i32 = arith.constant 0 : i32
    %c0_i32_0 = arith.constant 0 : i32
    %c0_i32_1 = arith.constant 0 : i32
    %c0_i32_2 = arith.constant 0 : i32
    %c0_i32_3 = arith.constant 0 : i32
    return %c0_i32, %c0_i32_0, %c0_i32_1, %c0_i32_2 : i32, i32, i32, i32
  }
  func.func @transform_1(%arg0: i32, %arg1: i32) -> (i32, i32, i32, i32) {
    %c0_i32 = arith.constant 0 : i32
    %c0_i32_0 = arith.constant 0 : i32
    %c0_i32_1 = arith.constant 0 : i32
    return %arg0, %c0_i32, %arg1, %c0_i32_0 : i32, i32, i32, i32
  }
  func.func @transform_2(%arg0: i32, %arg1: i32) -> (i32, i32, i32, i32) {
    %c0_i32 = arith.constant 0 : i32
    %c0_i32_0 = arith.constant 0 : i32
    %c0_i32_1 = arith.constant 0 : i32
    return %arg0, %c0_i32, %arg1, %c0_i32_0 : i32, i32, i32, i32
  }
}

</mosaic_0001>

<llo_original>
// kernel: tpu_custom_call.1
$region0: #{tpu_custom_call.1}
  #allocation0 [shape = 'u32[]', space=smem, size = 0x4, offset = 0x4, fixed_abs, tag = 'smem constant byte address 0x4 - core index']
  #allocation1 [shape = 'u32[144,128]{1,0:T(1,128)}', space=vmem, size = 0x12000, scoped, tag = 'internal scratch']
  %s0 = inlined_call_operand.hbm [shape: f32[1,4,1,1], index: 0, kind: input, shape index: {}]
  %s1 = inlined_call_operand.hbm [shape: f32[2,4,1,1024], index: 1, kind: input, shape index: {}]
  %s2 = inlined_call_operand.hbm [shape: f32[2,4,1,1024], index: 2, kind: output, shape index: {}]
  %s3 = sld [smem:[#allocation0]]
  $region26: #{tpu_custom_call.1} parent=0
    _
  %s5 = ssub.s32 1, %s3
  %s6 = scalar_select 0, %s5, %s3
  $region1: #{tpu_custom_call.1} parent=0
    #allocation2 [shape = 'u8[2048]{0}', space=vmem, size = 0x800, scoped, tag = 'input window, operand 0, single buffered']
    #allocation3 [shape = 's32[1]{0}', space=sflag, size = 0x4, scoped, tag = 'scoped memory for tpu_custom_call.1']
    #allocation4 [shape = 's32[1]{0}', space=sflag, size = 0x4, scoped, tag = 'scoped memory for tpu_custom_call.1']
    #allocation5 [shape = 'u8[32768]{0}', space=vmem, size = 0x8000, scoped, tag = 'input window, operand 1, single buffered']
    #allocation6 [shape = 's32[1]{0}', space=sflag, size = 0x4, scoped, tag = 'scoped memory for tpu_custom_call.1']
    #allocation7 [shape = 'u8[32768]{0}', space=vmem, size = 0x8000, scoped, tag = 'output window, operand 0, single buffered']
    %7 = vsyncpa [#allocation3], 0
    %8 = vsyncpa [#allocation6], 0
    %9 = vsyncpa [#allocation4], 0
    // Predicated region
    $region2: #{tpu_custom_call.1} parent=1 // pred_check
      _
    $region3: #{tpu_custom_call.1} parent=1 // pred_check_branch
      %11 = sbr.rel (0) target = $region5
    $region4: #{tpu_custom_call.1} parent=1 // pred_region
      %s13 = ssub.s32 64, 64
      %14 = vsyncadd [#allocation3], %s13
      %s15 = sshll.u32 [#allocation2], 4
      %s16 = int_to_ptr.vmem [resolvable:$true] %s15
      %21 = dma.hbm_to_vmem [thread:$0]  %s0, 64, %s16, [#allocation3], 16, 16, 1
    $region5: #{tpu_custom_call.1} parent=1 // pred_fallthru
      _
    // Predicated region
    $region6: #{tpu_custom_call.1} parent=1 // pred_check
      _
    $region7: #{tpu_custom_call.1} parent=1 // pred_check_branch
      %23 = sbr.rel (0) target = $region9
    $region8: #{tpu_custom_call.1} parent=1 // pred_region
      %s25 = ssub.s32 1024, 1024
      %26 = vsyncadd [#allocation6], %s25
      %s27 = sshll.u32 [#allocation5], 4
      %s28 = int_to_ptr.vmem [resolvable:$true] %s27
      %33 = dma.hbm_to_vmem [thread:$0]  %s1, 1024, %s28, [#allocation6], 128, 128, 8
    $region9: #{tpu_custom_call.1} parent=1 // pred_fallthru
      _
    // Predicated region
    $region10: #{tpu_custom_call.1} parent=1 // pred_check
      _
    $region11: #{tpu_custom_call.1} parent=1 // pred_check_branch
      %35 = sbr.rel (0) target = $region13
    $region12: #{tpu_custom_call.1} parent=1 // pred_region
      %36 = dma.done [#allocation3], 64
    $region13: #{tpu_custom_call.1} parent=1 // pred_fallthru
      _
    // Predicated region
    $region14: #{tpu_custom_call.1} parent=1 // pred_check
      _
    $region15: #{tpu_custom_call.1} parent=1 // pred_check_branch
      %38 = sbr.rel (0) target = $region17
    $region16: #{tpu_custom_call.1} parent=1 // pred_region
      %39 = dma.done [#allocation6], 1024
    $region17: #{tpu_custom_call.1} parent=1 // pred_fallthru
      _
    %v40 = vld [vmem:[#allocation5] sm:$0xff]
    %v41 = vld [vmem:[#allocation5 + $0x8] sm:$0xff]
    %v42 = vld [vmem:[#allocation5 + $0x10] sm:$0xff]
    %v43 = vld [vmem:[#allocation5 + $0x18] sm:$0xff]
    %v44 = vld [vmem:[#allocation5 + $0x20] sm:$0xff]
    %v45 = vld [vmem:[#allocation5 + $0x28] sm:$0xff]
    %v46 = vld [vmem:[#allocation5 + $0x30] sm:$0xff]
    %v47 = vld [vmem:[#allocation5 + $0x38] sm:$0xff]
    %v56 = vlaneseq
    %v57 = vshrl.u32 %v56, 7
    %v58 = vsub.s32 0, %v57
    %v59 = vrot.slane %v40, %v58
    %v60 = vlaneseq
    %v61 = vshrl.u32 %v60, 7
    %v62 = vsub.s32 1, %v61
    %v63 = vrot.slane %v40, %v62
    %v64 = vlaneseq
    %v65 = vshrl.u32 %v64, 7
    %v66 = vsub.s32 2, %v65
    %v67 = vrot.slane %v40, %v66
    %v68 = vlaneseq
    %v69 = vshrl.u32 %v68, 7
    %v70 = vsub.s32 3, %v69
    %v71 = vrot.slane %v40, %v70
    %v72 = vlaneseq
    %v73 = vshrl.u32 %v72, 7
    %v74 = vsub.s32 4, %v73
    %v75 = vrot.slane %v40, %v74
    %v76 = vlaneseq
    %v77 = vshrl.u32 %v76, 7
    %v78 = vsub.s32 5, %v77
    %v79 = vrot.slane %v40, %v78
    %v80 = vlaneseq
    %v81 = vshrl.u32 %v80, 7
    %v82 = vsub.s32 6, %v81
    %v83 = vrot.slane %v40, %v82
    %v84 = vlaneseq
    %v85 = vshrl.u32 %v84, 7
    %v86 = vsub.s32 7, %v85
    %v87 = vrot.slane %v40, %v86
    %v88 = vlaneseq
    %v89 = vshrl.u32 %v88, 7
    %v90 = vsub.s32 0, %v89
    %v91 = vrot.slane %v41, %v90
    %v92 = vlaneseq
    %v93 = vshrl.u32 %v92, 7
    %v94 = vsub.s32 1, %v93
    %v95 = vrot.slane %v41, %v94
    %v96 = vlaneseq
    %v97 = vshrl.u32 %v96, 7
    %v98 = vsub.s32 2, %v97
    %v99 = vrot.slane %v41, %v98
    %v100 = vlaneseq
    %v101 = vshrl.u32 %v100, 7
    %v102 = vsub.s32 3, %v101
    %v103 = vrot.slane %v41, %v102
    %v104 = vlaneseq
    %v105 = vshrl.u32 %v104, 7
    %v106 = vsub.s32 4, %v105
    %v107 = vrot.slane %v41, %v106
    %v108 = vlaneseq
    %v109 = vshrl.u32 %v108, 7
    %v110 = vsub.s32 5, %v109
    %v111 = vrot.slane %v41, %v110
    %v112 = vlaneseq
    %v113 = vshrl.u32 %v112, 7
    %v114 = vsub.s32 6, %v113
    %v115 = vrot.slane %v41, %v114
    %v116 = vlaneseq
    %v117 = vshrl.u32 %v116, 7
    %v118 = vsub.s32 7, %v117
    %v119 = vrot.slane %v41, %v118
    %v120 = vlaneseq
    %v121 = vshrl.u32 %v120, 7
    %v122 = vsub.s32 0, %v121
    %v123 = vrot.slane %v42, %v122
    %v124 = vlaneseq
    %v125 = vshrl.u32 %v124, 7
    %v126 = vsub.s32 1, %v125
    %v127 = vrot.slane %v42, %v126
    %v128 = vlaneseq
    %v129 = vshrl.u32 %v128, 7
    %v130 = vsub.s32 2, %v129
    %v131 = vrot.slane %v42, %v130
    %v132 = vlaneseq
    %v133 = vshrl.u32 %v132, 7
    %v134 = vsub.s32 3, %v133
    %v135 = vrot.slane %v42, %v134
    %v136 = vlaneseq
    %v137 = vshrl.u32 %v136, 7
    %v138 = vsub.s32 4, %v137
    %v139 = vrot.slane %v42, %v138
    %v140 = vlaneseq
    %v141 = vshrl.u32 %v140, 7
    %v142 = vsub.s32 5, %v141
    %v143 = vrot.slane %v42, %v142
    %v144 = vlaneseq
    %v145 = vshrl.u32 %v144, 7
    %v146 = vsub.s32 6, %v145
    %v147 = vrot.slane %v42, %v146
    %v148 = vlaneseq
    %v149 = vshrl.u32 %v148, 7
    %v150 = vsub.s32 7, %v149
    %v151 = vrot.slane %v42, %v150
    %v152 = vlaneseq
    %v153 = vshrl.u32 %v152, 7
    %v154 = vsub.s32 0, %v153
    %v155 = vrot.slane %v43, %v154
    %v156 = vlaneseq
    %v157 = vshrl.u32 %v156, 7
    %v158 = vsub.s32 1, %v157
    %v159 = vrot.slane %v43, %v158
    %v160 = vlaneseq
    %v161 = vshrl.u32 %v160, 7
    %v162 = vsub.s32 2, %v161
    %v163 = vrot.slane %v43, %v162
    %v164 = vlaneseq
    %v165 = vshrl.u32 %v164, 7
    %v166 = vsub.s32 3, %v165
    %v167 = vrot.slane %v43, %v166
    %v168 = vlaneseq
    %v169 = vshrl.u32 %v168, 7
    %v170 = vsub.s32 4, %v169
    %v171 = vrot.slane %v43, %v170
    %v172 = vlaneseq
    %v173 = vshrl.u32 %v172, 7
    %v174 = vsub.s32 5, %v173
    %v175 = vrot.slane %v43, %v174
    %v176 = vlaneseq
    %v177 = vshrl.u32 %v176, 7
    %v178 = vsub.s32 6, %v177
    %v179 = vrot.slane %v43, %v178
    %v180 = vlaneseq
    %v181 = vshrl.u32 %v180, 7
    %v182 = vsub.s32 7, %v181
    %v183 = vrot.slane %v43, %v182
    %v184 = vlaneseq
    %v185 = vshrl.u32 %v184, 7
    %v186 = vsub.s32 0, %v185
    %v187 = vrot.slane %v44, %v186
    %v188 = vlaneseq
    %v189 = vshrl.u32 %v188, 7
    %v190 = vsub.s32 1, %v189
    %v191 = vrot.slane %v44, %v190
    %v192 = vlaneseq
    %v193 = vshrl.u32 %v192, 7
    %v194 = vsub.s32 2, %v193
    %v195 = vrot.slane %v44, %v194
    %v196 = vlaneseq
    %v197 = vshrl.u32 %v196, 7
    %v198 = vsub.s32 3, %v197
    %v199 = vrot.slane %v44, %v198
    %v200 = vlaneseq
    %v201 = vshrl.u32 %v200, 7
    %v202 = vsub.s32 4, %v201
    %v203 = vrot.slane %v44, %v202
    %v204 = vlaneseq
    %v205 = vshrl.u32 %v204, 7
    %v206 = vsub.s32 5, %v205
    %v207 = vrot.slane %v44, %v206
    %v208 = vlaneseq
    %v209 = vshrl.u32 %v208, 7
    %v210 = vsub.s32 6, %v209
    %v211 = vrot.slane %v44, %v210
    %v212 = vlaneseq
    %v213 = vshrl.u32 %v212, 7
    %v214 = vsub.s32 7, %v213
    %v215 = vrot.slane %v44, %v214
    %v216 = vlaneseq
    %v217 = vshrl.u32 %v216, 7
    %v218 = vsub.s32 0, %v217
    %v219 = vrot.slane %v45, %v218
    %v220 = vlaneseq
    %v221 = vshrl.u32 %v220, 7
    %v222 = vsub.s32 1, %v221
    %v223 = vrot.slane %v45, %v222
    %v224 = vlaneseq
    %v225 = vshrl.u32 %v224, 7
    %v226 = vsub.s32 2, %v225
    %v227 = vrot.slane %v45, %v226
    %v228 = vlaneseq
    %v229 = vshrl.u32 %v228, 7
    %v230 = vsub.s32 3, %v229
    %v231 = vrot.slane %v45, %v230
    %v232 = vlaneseq
    %v233 = vshrl.u32 %v232, 7
    %v234 = vsub.s32 4, %v233
    %v235 = vrot.slane %v45, %v234
    %v236 = vlaneseq
    %v237 = vshrl.u32 %v236, 7
    %v238 = vsub.s32 5, %v237
    %v239 = vrot.slane %v45, %v238
    %v240 = vlaneseq
    %v241 = vshrl.u32 %v240, 7
    %v242 = vsub.s32 6, %v241
    %v243 = vrot.slane %v45, %v242
    %v244 = vlaneseq
    %v245 = vshrl.u32 %v244, 7
    %v246 = vsub.s32 7, %v245
    %v247 = vrot.slane %v45, %v246
    %v248 = vlaneseq
    %v249 = vshrl.u32 %v248, 7
    %v250 = vsub.s32 0, %v249
    %v251 = vrot.slane %v46, %v250
    %v252 = vlaneseq
    %v253 = vshrl.u32 %v252, 7
    %v254 = vsub.s32 1, %v253
    %v255 = vrot.slane %v46, %v254
    %v256 = vlaneseq
    %v257 = vshrl.u32 %v256, 7
    %v258 = vsub.s32 2, %v257
    %v259 = vrot.slane %v46, %v258
    %v260 = vlaneseq
    %v261 = vshrl.u32 %v260, 7
    %v262 = vsub.s32 3, %v261
    %v263 = vrot.slane %v46, %v262
    %v264 = vlaneseq
    %v265 = vshrl.u32 %v264, 7
    %v266 = vsub.s32 4, %v265
    %v267 = vrot.slane %v46, %v266
    %v268 = vlaneseq
    %v269 = vshrl.u32 %v268, 7
    %v270 = vsub.s32 5, %v269
    %v271 = vrot.slane %v46, %v270
    %v272 = vlaneseq
    %v273 = vshrl.u32 %v272, 7
    %v274 = vsub.s32 6, %v273
    %v275 = vrot.slane %v46, %v274
    %v276 = vlaneseq
    %v277 = vshrl.u32 %v276, 7
    %v278 = vsub.s32 7, %v277
    %v279 = vrot.slane %v46, %v278
    %v280 = vlaneseq
    %v281 = vshrl.u32 %v280, 7
    %v282 = vsub.s32 0, %v281
    %v283 = vrot.slane %v47, %v282
    %v284 = vlaneseq
    %v285 = vshrl.u32 %v284, 7
    %v286 = vsub.s32 1, %v285
    %v287 = vrot.slane %v47, %v286
    %v288 = vlaneseq
    %v289 = vshrl.u32 %v288, 7
    %v290 = vsub.s32 2, %v289
    %v291 = vrot.slane %v47, %v290
    %v292 = vlaneseq
    %v293 = vshrl.u32 %v292, 7
    %v294 = vsub.s32 3, %v293
    %v295 = vrot.slane %v47, %v294
    %v296 = vlaneseq
    %v297 = vshrl.u32 %v296, 7
    %v298 = vsub.s32 4, %v297
    %v299 = vrot.slane %v47, %v298
    %v300 = vlaneseq
    %v301 = vshrl.u32 %v300, 7
    %v302 = vsub.s32 5, %v301
    %v303 = vrot.slane %v47, %v302
    %v304 = vlaneseq
    %v305 = vshrl.u32 %v304, 7
    %v306 = vsub.s32 6, %v305
    %v307 = vrot.slane %v47, %v306
    %v308 = vlaneseq
    %v309 = vshrl.u32 %v308, 7
    %v310 = vsub.s32 7, %v309
    %v311 = vrot.slane %v47, %v310
    %vm376 = vcmask 1040384
    %v377 = vsel %vm376, %v59, 0.0
    %v378 = vsel %vm376, %v91, 0.0
    %v379 = vadd.f32 %v377, %v378
    %v380 = vsel %vm376, %v123, 0.0
    %v381 = vadd.f32 %v379, %v380
    %v382 = vsel %vm376, %v155, 0.0
    %v383 = vadd.f32 %v381, %v382
    %v384 = vsel %vm376, %v63, 0.0
    %v385 = vsel %vm376, %v95, 0.0
    %v386 = vadd.f32 %v384, %v385
    %v387 = vsel %vm376, %v127, 0.0
    %v388 = vadd.f32 %v386, %v387
    %v389 = vsel %vm376, %v159, 0.0
    %v390 = vadd.f32 %v388, %v389
    %v391 = vsel %vm376, %v67, 0.0
    %v392 = vsel %vm376, %v99, 0.0
    %v393 = vadd.f32 %v391, %v392
    %v394 = vsel %vm376, %v131, 0.0
    %v395 = vadd.f32 %v393, %v394
    %v396 = vsel %vm376, %v163, 0.0
    %v397 = vadd.f32 %v395, %v396
    %v398 = vsel %vm376, %v71, 0.0
    %v399 = vsel %vm376, %v103, 0.0
    %v400 = vadd.f32 %v398, %v399
    %v401 = vsel %vm376, %v135, 0.0
    %v402 = vadd.f32 %v400, %v401
    %v403 = vsel %vm376, %v167, 0.0
    %v404 = vadd.f32 %v402, %v403
    %v405 = vsel %vm376, %v75, 0.0
    %v406 = vsel %vm376, %v107, 0.0
    %v407 = vadd.f32 %v405, %v406
    %v408 = vsel %vm376, %v139, 0.0
    %v409 = vadd.f32 %v407, %v408
    %v410 = vsel %vm376, %v171, 0.0
    %v411 = vadd.f32 %v409, %v410
    %v412 = vsel %vm376, %v79, 0.0
    %v413 = vsel %vm376, %v111, 0.0
    %v414 = vadd.f32 %v412, %v413
    %v415 = vsel %vm376, %v143, 0.0
    %v416 = vadd.f32 %v414, %v415
    %v417 = vsel %vm376, %v175, 0.0
    %v418 = vadd.f32 %v416, %v417
    %v419 = vsel %vm376, %v83, 0.0
    %v420 = vsel %vm376, %v115, 0.0
    %v421 = vadd.f32 %v419, %v420
    %v422 = vsel %vm376, %v147, 0.0
    %v423 = vadd.f32 %v421, %v422
    %v424 = vsel %vm376, %v179, 0.0
    %v425 = vadd.f32 %v423, %v424
    %v426 = vsel %vm376, %v87, 0.0
    %v427 = vsel %vm376, %v119, 0.0
    %v428 = vadd.f32 %v426, %v427
    %v429 = vsel %vm376, %v151, 0.0
    %v430 = vadd.f32 %v428, %v429
    %v431 = vsel %vm376, %v183, 0.0
    %v432 = vadd.f32 %v430, %v431
    %v433 = vsel %vm376, %v187, 0.0
    %v434 = vsel %vm376, %v219, 0.0
    %v435 = vadd.f32 %v433, %v434
    %v436 = vsel %vm376, %v251, 0.0
    %v437 = vadd.f32 %v435, %v436
    %v438 = vsel %vm376, %v283, 0.0
    %v439 = vadd.f32 %v437, %v438
    %v440 = vsel %vm376, %v191, 0.0
    %v441 = vsel %vm376, %v223, 0.0
    %v442 = vadd.f32 %v440, %v441
    %v443 = vsel %vm376, %v255, 0.0
    %v444 = vadd.f32 %v442, %v443
    %v445 = vsel %vm376, %v287, 0.0
    %v446 = vadd.f32 %v444, %v445
    %v447 = vsel %vm376, %v195, 0.0
    %v448 = vsel %vm376, %v227, 0.0
    %v449 = vadd.f32 %v447, %v448
    %v450 = vsel %vm376, %v259, 0.0
    %v451 = vadd.f32 %v449, %v450
    %v452 = vsel %vm376, %v291, 0.0
    %v453 = vadd.f32 %v451, %v452
    %v454 = vsel %vm376, %v199, 0.0
    %v455 = vsel %vm376, %v231, 0.0
    %v456 = vadd.f32 %v454, %v455
    %v457 = vsel %vm376, %v263, 0.0
    %v458 = vadd.f32 %v456, %v457
    %v459 = vsel %vm376, %v295, 0.0
    %v460 = vadd.f32 %v458, %v459
    %v461 = vsel %vm376, %v203, 0.0
    %v462 = vsel %vm376, %v235, 0.0
    %v463 = vadd.f32 %v461, %v462
    %v464 = vsel %vm376, %v267, 0.0
    %v465 = vadd.f32 %v463, %v464
    %v466 = vsel %vm376, %v299, 0.0
    %v467 = vadd.f32 %v465, %v466
    %v468 = vsel %vm376, %v207, 0.0
    %v469 = vsel %vm376, %v239, 0.0
    %v470 = vadd.f32 %v468, %v469
    %v471 = vsel %vm376, %v271, 0.0
    %v472 = vadd.f32 %v470, %v471
    %v473 = vsel %vm376, %v303, 0.0
    %v474 = vadd.f32 %v472, %v473
    %v475 = vsel %vm376, %v211, 0.0
    %v476 = vsel %vm376, %v243, 0.0
    %v477 = vadd.f32 %v475, %v476
    %v478 = vsel %vm376, %v275, 0.0
    %v479 = vadd.f32 %v477, %v478
    %v480 = vsel %vm376, %v307, 0.0
    %v481 = vadd.f32 %v479, %v480
    %v482 = vsel %vm376, %v215, 0.0
    %v483 = vsel %vm376, %v247, 0.0
    %v484 = vadd.f32 %v482, %v483
    %v485 = vsel %vm376, %v279, 0.0
    %v486 = vadd.f32 %v484, %v485
    %v487 = vsel %vm376, %v311, 0.0
    %v488 = vadd.f32 %v486, %v487
    %v489 = vmul.f32 %v383, 0.25
    %v490 = vmul.f32 %v390, 0.25
    %v491 = vmul.f32 %v397, 0.25
    %v492 = vmul.f32 %v404, 0.25
    %v493 = vmul.f32 %v411, 0.25
    %v494 = vmul.f32 %v418, 0.25
    %v495 = vmul.f32 %v425, 0.25
    %v496 = vmul.f32 %v432, 0.25
    %v497 = vmul.f32 %v439, 0.25
    %v498 = vmul.f32 %v446, 0.25
    %v499 = vmul.f32 %v453, 0.25
    %v500 = vmul.f32 %v460, 0.25
    %v501 = vmul.f32 %v467, 0.25
    %v502 = vmul.f32 %v474, 0.25
    %v503 = vmul.f32 %v481, 0.25
    %v504 = vmul.f32 %v488, 0.25
    %v521 = vcombine.low %v489, %v490
    %v522 = vcombine.low %v491, %v492
    %v523 = vcombine.low %v493, %v494
    %v524 = vcombine.low %v495, %v496
    %v526 = vunpack.c.l.s4 1966171168
    %v527 = vunpack.c.0.s8 %v526
    %v528 = vlaneseq
    %v529 = vshrl.u32 %v528, 7
    %v530 = vsub.s32 %v527, %v529
    %v531 = vrot.slane %v521, %v530
    %v533 = vunpack.c.l.s4 1966171168
    %v534 = vunpack.c.0.s8 %v533
    %v535 = vlaneseq
    %v536 = vshrl.u32 %v535, 7
    %v537 = vsub.s32 %v534, %v536
    %v538 = vrot.slane %v522, %v537
    %v540 = vunpack.c.l.s4 1966171168
    %v541 = vunpack.c.0.s8 %v540
    %v542 = vlaneseq
    %v543 = vshrl.u32 %v542, 7
    %v544 = vsub.s32 %v541, %v543
    %v545 = vrot.slane %v523, %v544
    %v547 = vunpack.c.l.s4 1966171168
    %v548 = vunpack.c.0.s8 %v547
    %v549 = vlaneseq
    %v550 = vshrl.u32 %v549, 7
    %v551 = vsub.s32 %v548, %v550
    %v552 = vrot.slane %v524, %v551
    %v553 = vcombine.low %v531, %v538
    %v554 = vcombine.low %v545, %v552
    %v556 = vunpack.c.l.s4 1966171168
    %v557 = vunpack.c.0.s8 %v556
    %v558 = vlaneseq
    %v559 = vshrl.u32 %v558, 7
    %v560 = vsub.s32 %v557, %v559
    %v561 = vrot.slane %v553, %v560
    %v563 = vunpack.c.l.s4 1966171168
    %v564 = vunpack.c.0.s8 %v563
    %v565 = vlaneseq
    %v566 = vshrl.u32 %v565, 7
    %v567 = vsub.s32 %v564, %v566
    %v568 = vrot.slane %v554, %v567
    %v569 = vcombine.low %v561, %v568
    %v570 = vcombine.low %v497, %v498
    %v571 = vcombine.low %v499, %v500
    %v572 = vcombine.low %v501, %v502
    %v573 = vcombine.low %v503, %v504
    %v575 = vunpack.c.l.s4 1966171168
    %v576 = vunpack.c.0.s8 %v575
    %v577 = vlaneseq
    %v578 = vshrl.u32 %v577, 7
    %v579 = vsub.s32 %v576, %v578
    %v580 = vrot.slane %v570, %v579
    %v582 = vunpack.c.l.s4 1966171168
    %v583 = vunpack.c.0.s8 %v582
    %v584 = vlaneseq
    %v585 = vshrl.u32 %v584, 7
    %v586 = vsub.s32 %v583, %v585
    %v587 = vrot.slane %v571, %v586
    %v589 = vunpack.c.l.s4 1966171168
    %v590 = vunpack.c.0.s8 %v589
    %v591 = vlaneseq
    %v592 = vshrl.u32 %v591, 7
    %v593 = vsub.s32 %v590, %v592
    %v594 = vrot.slane %v572, %v593
    %v596 = vunpack.c.l.s4 1966171168
    %v597 = vunpack.c.0.s8 %v596
    %v598 = vlaneseq
    %v599 = vshrl.u32 %v598, 7
    %v600 = vsub.s32 %v597, %v599
    %v601 = vrot.slane %v573, %v600
    %v602 = vcombine.low %v580, %v587
    %v603 = vcombine.low %v594, %v601
    %v605 = vunpack.c.l.s4 1966171168
    %v606 = vunpack.c.0.s8 %v605
    %v607 = vlaneseq
    %v608 = vshrl.u32 %v607, 7
    %v609 = vsub.s32 %v606, %v608
    %v610 = vrot.slane %v602, %v609
    %v612 = vunpack.c.l.s4 1966171168
    %v613 = vunpack.c.0.s8 %v612
    %v614 = vlaneseq
    %v615 = vshrl.u32 %v614, 7
    %v616 = vsub.s32 %v613, %v615
    %v617 = vrot.slane %v603, %v616
    %v618 = vcombine.low %v610, %v617
    %v621 = vsub.f32 %v40, %v569
    %v622 = vsub.f32 %v41, %v569
    %v623 = vsub.f32 %v42, %v569
    %v624 = vsub.f32 %v43, %v569
    %v625 = vsub.f32 %v44, %v618
    %v626 = vsub.f32 %v45, %v618
    %v627 = vsub.f32 %v46, %v618
    %v628 = vsub.f32 %v47, %v618
    %v629 = vmul.f32 %v621, %v621
    %v630 = vmul.f32 %v622, %v622
    %v631 = vmul.f32 %v623, %v623
    %v632 = vmul.f32 %v624, %v624
    %v633 = vmul.f32 %v625, %v625
    %v634 = vmul.f32 %v626, %v626
    %v635 = vmul.f32 %v627, %v627
    %v636 = vmul.f32 %v628, %v628
    %v645 = vlaneseq
    %v646 = vshrl.u32 %v645, 7
    %v647 = vsub.s32 0, %v646
    %v648 = vrot.slane %v629, %v647
    %v649 = vlaneseq
    %v650 = vshrl.u32 %v649, 7
    %v651 = vsub.s32 1, %v650
    %v652 = vrot.slane %v629, %v651
    %v653 = vlaneseq
    %v654 = vshrl.u32 %v653, 7
    %v655 = vsub.s32 2, %v654
    %v656 = vrot.slane %v629, %v655
    %v657 = vlaneseq
    %v658 = vshrl.u32 %v657, 7
    %v659 = vsub.s32 3, %v658
    %v660 = vrot.slane %v629, %v659
    %v661 = vlaneseq
    %v662 = vshrl.u32 %v661, 7
    %v663 = vsub.s32 4, %v662
    %v664 = vrot.slane %v629, %v663
    %v665 = vlaneseq
    %v666 = vshrl.u32 %v665, 7
    %v667 = vsub.s32 5, %v666
    %v668 = vrot.slane %v629, %v667
    %v669 = vlaneseq
    %v670 = vshrl.u32 %v669, 7
    %v671 = vsub.s32 6, %v670
    %v672 = vrot.slane %v629, %v671
    %v673 = vlaneseq
    %v674 = vshrl.u32 %v673, 7
    %v675 = vsub.s32 7, %v674
    %v676 = vrot.slane %v629, %v675
    %v677 = vlaneseq
    %v678 = vshrl.u32 %v677, 7
    %v679 = vsub.s32 0, %v678
    %v680 = vrot.slane %v630, %v679
    %v681 = vlaneseq
    %v682 = vshrl.u32 %v681, 7
    %v683 = vsub.s32 1, %v682
    %v684 = vrot.slane %v630, %v683
    %v685 = vlaneseq
    %v686 = vshrl.u32 %v685, 7
    %v687 = vsub.s32 2, %v686
    %v688 = vrot.slane %v630, %v687
    %v689 = vlaneseq
    %v690 = vshrl.u32 %v689, 7
    %v691 = vsub.s32 3, %v690
    %v692 = vrot.slane %v630, %v691
    %v693 = vlaneseq
    %v694 = vshrl.u32 %v693, 7
    %v695 = vsub.s32 4, %v694
    %v696 = vrot.slane %v630, %v695
    %v697 = vlaneseq
    %v698 = vshrl.u32 %v697, 7
    %v699 = vsub.s32 5, %v698
    %v700 = vrot.slane %v630, %v699
    %v701 = vlaneseq
    %v702 = vshrl.u32 %v701, 7
    %v703 = vsub.s32 6, %v702
    %v704 = vrot.slane %v630, %v703
    %v705 = vlaneseq
    %v706 = vshrl.u32 %v705, 7
    %v707 = vsub.s32 7, %v706
    %v708 = vrot.slane %v630, %v707
    %v709 = vlaneseq
    %v710 = vshrl.u32 %v709, 7
    %v711 = vsub.s32 0, %v710
    %v712 = vrot.slane %v631, %v711
    %v713 = vlaneseq
    %v714 = vshrl.u32 %v713, 7
    %v715 = vsub.s32 1, %v714
    %v716 = vrot.slane %v631, %v715
    %v717 = vlaneseq
    %v718 = vshrl.u32 %v717, 7
    %v719 = vsub.s32 2, %v718
    %v720 = vrot.slane %v631, %v719
    %v721 = vlaneseq
    %v722 = vshrl.u32 %v721, 7
    %v723 = vsub.s32 3, %v722
    %v724 = vrot.slane %v631, %v723
    %v725 = vlaneseq
    %v726 = vshrl.u32 %v725, 7
    %v727 = vsub.s32 4, %v726
    %v728 = vrot.slane %v631, %v727
    %v729 = vlaneseq
    %v730 = vshrl.u32 %v729, 7
    %v731 = vsub.s32 5, %v730
    %v732 = vrot.slane %v631, %v731
    %v733 = vlaneseq
    %v734 = vshrl.u32 %v733, 7
    %v735 = vsub.s32 6, %v734
    %v736 = vrot.slane %v631, %v735
    %v737 = vlaneseq
    %v738 = vshrl.u32 %v737, 7
    %v739 = vsub.s32 7, %v738
    %v740 = vrot.slane %v631, %v739
    %v741 = vlaneseq
    %v742 = vshrl.u32 %v741, 7
    %v743 = vsub.s32 0, %v742
    %v744 = vrot.slane %v632, %v743
    %v745 = vlaneseq
    %v746 = vshrl.u32 %v745, 7
    %v747 = vsub.s32 1, %v746
    %v748 = vrot.slane %v632, %v747
    %v749 = vlaneseq
    %v750 = vshrl.u32 %v749, 7
    %v751 = vsub.s32 2, %v750
    %v752 = vrot.slane %v632, %v751
    %v753 = vlaneseq
    %v754 = vshrl.u32 %v753, 7
    %v755 = vsub.s32 3, %v754
    %v756 = vrot.slane %v632, %v755
    %v757 = vlaneseq
    %v758 = vshrl.u32 %v757, 7
    %v759 = vsub.s32 4, %v758
    %v760 = vrot.slane %v632, %v759
    %v761 = vlaneseq
    %v762 = vshrl.u32 %v761, 7
    %v763 = vsub.s32 5, %v762
    %v764 = vrot.slane %v632, %v763
    %v765 = vlaneseq
    %v766 = vshrl.u32 %v765, 7
    %v767 = vsub.s32 6, %v766
    %v768 = vrot.slane %v632, %v767
    %v769 = vlaneseq
    %v770 = vshrl.u32 %v769, 7
    %v771 = vsub.s32 7, %v770
    %v772 = vrot.slane %v632, %v771
    %v773 = vlaneseq
    %v774 = vshrl.u32 %v773, 7
    %v775 = vsub.s32 0, %v774
    %v776 = vrot.slane %v633, %v775
    %v777 = vlaneseq
    %v778 = vshrl.u32 %v777, 7
    %v779 = vsub.s32 1, %v778
    %v780 = vrot.slane %v633, %v779
    %v781 = vlaneseq
    %v782 = vshrl.u32 %v781, 7
    %v783 = vsub.s32 2, %v782
    %v784 = vrot.slane %v633, %v783
    %v785 = vlaneseq
    %v786 = vshrl.u32 %v785, 7
    %v787 = vsub.s32 3, %v786
    %v788 = vrot.slane %v633, %v787
    %v789 = vlaneseq
    %v790 = vshrl.u32 %v789, 7
    %v791 = vsub.s32 4, %v790
    %v792 = vrot.slane %v633, %v791
    %v793 = vlaneseq
    %v794 = vshrl.u32 %v793, 7
    %v795 = vsub.s32 5, %v794
    %v796 = vrot.slane %v633, %v795
    %v797 = vlaneseq
    %v798 = vshrl.u32 %v797, 7
    %v799 = vsub.s32 6, %v798
    %v800 = vrot.slane %v633, %v799
    %v801 = vlaneseq
    %v802 = vshrl.u32 %v801, 7
    %v803 = vsub.s32 7, %v802
    %v804 = vrot.slane %v633, %v803
    %v805 = vlaneseq
    %v806 = vshrl.u32 %v805, 7
    %v807 = vsub.s32 0, %v806
    %v808 = vrot.slane %v634, %v807
    %v809 = vlaneseq
    %v810 = vshrl.u32 %v809, 7
    %v811 = vsub.s32 1, %v810
    %v812 = vrot.slane %v634, %v811
    %v813 = vlaneseq
    %v814 = vshrl.u32 %v813, 7
    %v815 = vsub.s32 2, %v814
    %v816 = vrot.slane %v634, %v815
    %v817 = vlaneseq
    %v818 = vshrl.u32 %v817, 7
    %v819 = vsub.s32 3, %v818
    %v820 = vrot.slane %v634, %v819
    %v821 = vlaneseq
    %v822 = vshrl.u32 %v821, 7
    %v823 = vsub.s32 4, %v822
    %v824 = vrot.slane %v634, %v823
    %v825 = vlaneseq
    %v826 = vshrl.u32 %v825, 7
    %v827 = vsub.s32 5, %v826
    %v828 = vrot.slane %v634, %v827
    %v829 = vlaneseq
    %v830 = vshrl.u32 %v829, 7
    %v831 = vsub.s32 6, %v830
    %v832 = vrot.slane %v634, %v831
    %v833 = vlaneseq
    %v834 = vshrl.u32 %v833, 7
    %v835 = vsub.s32 7, %v834
    %v836 = vrot.slane %v634, %v835
    %v837 = vlaneseq
    %v838 = vshrl.u32 %v837, 7
    %v839 = vsub.s32 0, %v838
    %v840 = vrot.slane %v635, %v839
    %v841 = vlaneseq
    %v842 = vshrl.u32 %v841, 7
    %v843 = vsub.s32 1, %v842
    %v844 = vrot.slane %v635, %v843
    %v845 = vlaneseq
    %v846 = vshrl.u32 %v845, 7
    %v847 = vsub.s32 2, %v846
    %v848 = vrot.slane %v635, %v847
    %v849 = vlaneseq
    %v850 = vshrl.u32 %v849, 7
    %v851 = vsub.s32 3, %v850
    %v852 = vrot.slane %v635, %v851
    %v853 = vlaneseq
    %v854 = vshrl.u32 %v853, 7
    %v855 = vsub.s32 4, %v854
    %v856 = vrot.slane %v635, %v855
    %v857 = vlaneseq
    %v858 = vshrl.u32 %v857, 7
    %v859 = vsub.s32 5, %v858
    %v860 = vrot.slane %v635, %v859
    %v861 = vlaneseq
    %v862 = vshrl.u32 %v861, 7
    %v863 = vsub.s32 6, %v862
    %v864 = vrot.slane %v635, %v863
    %v865 = vlaneseq
    %v866 = vshrl.u32 %v865, 7
    %v867 = vsub.s32 7, %v866
    %v868 = vrot.slane %v635, %v867
    %v869 = vlaneseq
    %v870 = vshrl.u32 %v869, 7
    %v871 = vsub.s32 0, %v870
    %v872 = vrot.slane %v636, %v871
    %v873 = vlaneseq
    %v874 = vshrl.u32 %v873, 7
    %v875 = vsub.s32 1, %v874
    %v876 = vrot.slane %v636, %v875
    %v877 = vlaneseq
    %v878 = vshrl.u32 %v877, 7
    %v879 = vsub.s32 2, %v878
    %v880 = vrot.slane %v636, %v879
    %v881 = vlaneseq
    %v882 = vshrl.u32 %v881, 7
    %v883 = vsub.s32 3, %v882
    %v884 = vrot.slane %v636, %v883
    %v885 = vlaneseq
    %v886 = vshrl.u32 %v885, 7
    %v887 = vsub.s32 4, %v886
    %v888 = vrot.slane %v636, %v887
    %v889 = vlaneseq
    %v890 = vshrl.u32 %v889, 7
    %v891 = vsub.s32 5, %v890
    %v892 = vrot.slane %v636, %v891
    %v893 = vlaneseq
    %v894 = vshrl.u32 %v893, 7
    %v895 = vsub.s32 6, %v894
    %v896 = vrot.slane %v636, %v895
    %v897 = vlaneseq
    %v898 = vshrl.u32 %v897, 7
    %v899 = vsub.s32 7, %v898
    %v900 = vrot.slane %v636, %v899
    %v965 = vsel %vm376, %v648, 0.0
    %v966 = vsel %vm376, %v680, 0.0
    %v967 = vadd.f32 %v965, %v966
    %v968 = vsel %vm376, %v712, 0.0
    %v969 = vadd.f32 %v967, %v968
    %v970 = vsel %vm376, %v744, 0.0
    %v971 = vadd.f32 %v969, %v970
    %v972 = vsel %vm376, %v652, 0.0
    %v973 = vsel %vm376, %v684, 0.0
    %v974 = vadd.f32 %v972, %v973
    %v975 = vsel %vm376, %v716, 0.0
    %v976 = vadd.f32 %v974, %v975
    %v977 = vsel %vm376, %v748, 0.0
    %v978 = vadd.f32 %v976, %v977
    %v979 = vsel %vm376, %v656, 0.0
    %v980 = vsel %vm376, %v688, 0.0
    %v981 = vadd.f32 %v979, %v980
    %v982 = vsel %vm376, %v720, 0.0
    %v983 = vadd.f32 %v981, %v982
    %v984 = vsel %vm376, %v752, 0.0
    %v985 = vadd.f32 %v983, %v984
    %v986 = vsel %vm376, %v660, 0.0
    %v987 = vsel %vm376, %v692, 0.0
    %v988 = vadd.f32 %v986, %v987
    %v989 = vsel %vm376, %v724, 0.0
    %v990 = vadd.f32 %v988, %v989
    %v991 = vsel %vm376, %v756, 0.0
    %v992 = vadd.f32 %v990, %v991
    %v993 = vsel %vm376, %v664, 0.0
    %v994 = vsel %vm376, %v696, 0.0
    %v995 = vadd.f32 %v993, %v994
    %v996 = vsel %vm376, %v728, 0.0
    %v997 = vadd.f32 %v995, %v996
    %v998 = vsel %vm376, %v760, 0.0
    %v999 = vadd.f32 %v997, %v998
    %v1000 = vsel %vm376, %v668, 0.0
    %v1001 = vsel %vm376, %v700, 0.0
    %v1002 = vadd.f32 %v1000, %v1001
    %v1003 = vsel %vm376, %v732, 0.0
    %v1004 = vadd.f32 %v1002, %v1003
    %v1005 = vsel %vm376, %v764, 0.0
    %v1006 = vadd.f32 %v1004, %v1005
    %v1007 = vsel %vm376, %v672, 0.0
    %v1008 = vsel %vm376, %v704, 0.0
    %v1009 = vadd.f32 %v1007, %v1008
    %v1010 = vsel %vm376, %v736, 0.0
    %v1011 = vadd.f32 %v1009, %v1010
    %v1012 = vsel %vm376, %v768, 0.0
    %v1013 = vadd.f32 %v1011, %v1012
    %v1014 = vsel %vm376, %v676, 0.0
    %v1015 = vsel %vm376, %v708, 0.0
    %v1016 = vadd.f32 %v1014, %v1015
    %v1017 = vsel %vm376, %v740, 0.0
    %v1018 = vadd.f32 %v1016, %v1017
    %v1019 = vsel %vm376, %v772, 0.0
    %v1020 = vadd.f32 %v1018, %v1019
    %v1021 = vsel %vm376, %v776, 0.0
    %v1022 = vsel %vm376, %v808, 0.0
    %v1023 = vadd.f32 %v1021, %v1022
    %v1024 = vsel %vm376, %v840, 0.0
    %v1025 = vadd.f32 %v1023, %v1024
    %v1026 = vsel %vm376, %v872, 0.0
    %v1027 = vadd.f32 %v1025, %v1026
    %v1028 = vsel %vm376, %v780, 0.0
    %v1029 = vsel %vm376, %v812, 0.0
    %v1030 = vadd.f32 %v1028, %v1029
    %v1031 = vsel %vm376, %v844, 0.0
    %v1032 = vadd.f32 %v1030, %v1031
    %v1033 = vsel %vm376, %v876, 0.0
    %v1034 = vadd.f32 %v1032, %v1033
    %v1035 = vsel %vm376, %v784, 0.0
    %v1036 = vsel %vm376, %v816, 0.0
    %v1037 = vadd.f32 %v1035, %v1036
    %v1038 = vsel %vm376, %v848, 0.0
    %v1039 = vadd.f32 %v1037, %v1038
    %v1040 = vsel %vm376, %v880, 0.0
    %v1041 = vadd.f32 %v1039, %v1040
    %v1042 = vsel %vm376, %v788, 0.0
    %v1043 = vsel %vm376, %v820, 0.0
    %v1044 = vadd.f32 %v1042, %v1043
    %v1045 = vsel %vm376, %v852, 0.0
    %v1046 = vadd.f32 %v1044, %v1045
    %v1047 = vsel %vm376, %v884, 0.0
    %v1048 = vadd.f32 %v1046, %v1047
    %v1049 = vsel %vm376, %v792, 0.0
    %v1050 = vsel %vm376, %v824, 0.0
    %v1051 = vadd.f32 %v1049, %v1050
    %v1052 = vsel %vm376, %v856, 0.0
    %v1053 = vadd.f32 %v1051, %v1052
    %v1054 = vsel %vm376, %v888, 0.0
    %v1055 = vadd.f32 %v1053, %v1054
    %v1056 = vsel %vm376, %v796, 0.0
    %v1057 = vsel %vm376, %v828, 0.0
    %v1058 = vadd.f32 %v1056, %v1057
    %v1059 = vsel %vm376, %v860, 0.0
    %v1060 = vadd.f32 %v1058, %v1059
    %v1061 = vsel %vm376, %v892, 0.0
    %v1062 = vadd.f32 %v1060, %v1061
    %v1063 = vsel %vm376, %v800, 0.0
    %v1064 = vsel %vm376, %v832, 0.0
    %v1065 = vadd.f32 %v1063, %v1064
    %v1066 = vsel %vm376, %v864, 0.0
    %v1067 = vadd.f32 %v1065, %v1066
    %v1068 = vsel %vm376, %v896, 0.0
    %v1069 = vadd.f32 %v1067, %v1068
    %v1070 = vsel %vm376, %v804, 0.0
    %v1071 = vsel %vm376, %v836, 0.0
    %v1072 = vadd.f32 %v1070, %v1071
    %v1073 = vsel %vm376, %v868, 0.0
    %v1074 = vadd.f32 %v1072, %v1073
    %v1075 = vsel %vm376, %v900, 0.0
    %v1076 = vadd.f32 %v1074, %v1075
    %v1077 = vmul.f32 %v971, 0.25
    %v1078 = vmul.f32 %v978, 0.25
    %v1079 = vmul.f32 %v985, 0.25
    %v1080 = vmul.f32 %v992, 0.25
    %v1081 = vmul.f32 %v999, 0.25
    %v1082 = vmul.f32 %v1006, 0.25
    %v1083 = vmul.f32 %v1013, 0.25
    %v1084 = vmul.f32 %v1020, 0.25
    %v1085 = vmul.f32 %v1027, 0.25
    %v1086 = vmul.f32 %v1034, 0.25
    %v1087 = vmul.f32 %v1041, 0.25
    %v1088 = vmul.f32 %v1048, 0.25
    %v1089 = vmul.f32 %v1055, 0.25
    %v1090 = vmul.f32 %v1062, 0.25
    %v1091 = vmul.f32 %v1069, 0.25
    %v1092 = vmul.f32 %v1076, 0.25
    %v1093 = vadd.f32 %v1077, 1e-05
    %v1094 = vadd.f32 %v1078, 1e-05
    %v1095 = vadd.f32 %v1079, 1e-05
    %v1096 = vadd.f32 %v1080, 1e-05
    %v1097 = vadd.f32 %v1081, 1e-05
    %v1098 = vadd.f32 %v1082, 1e-05
    %v1099 = vadd.f32 %v1083, 1e-05
    %v1100 = vadd.f32 %v1084, 1e-05
    %v1101 = vadd.f32 %v1085, 1e-05
    %v1102 = vadd.f32 %v1086, 1e-05
    %v1103 = vadd.f32 %v1087, 1e-05
    %v1104 = vadd.f32 %v1088, 1e-05
    %v1105 = vadd.f32 %v1089, 1e-05
    %v1106 = vadd.f32 %v1090, 1e-05
    %v1107 = vadd.f32 %v1091, 1e-05
    %v1108 = vadd.f32 %v1092, 1e-05
    %v1109 = vrsqrt.pop %v1093
    %v1110 = vrsqrt.pop %v1094
    %v1111 = vrsqrt.pop %v1095
    %v1112 = vrsqrt.pop %v1096
    %v1113 = vrsqrt.pop %v1097
    %v1114 = vrsqrt.pop %v1098
    %v1115 = vrsqrt.pop %v1099
    %v1116 = vrsqrt.pop %v1100
    %v1117 = vrsqrt.pop %v1101
    %v1118 = vrsqrt.pop %v1102
    %v1119 = vrsqrt.pop %v1103
    %v1120 = vrsqrt.pop %v1104
    %v1121 = vrsqrt.pop %v1105
    %v1122 = vrsqrt.pop %v1106
    %v1123 = vrsqrt.pop %v1107
    %v1124 = vrsqrt.pop %v1108
    %v1141 = vcombine.low %v1109, %v1110
    %v1142 = vcombine.low %v1111, %v1112
    %v1143 = vcombine.low %v1113, %v1114
    %v1144 = vcombine.low %v1115, %v1116
    %v1146 = vunpack.c.l.s4 1966171168
    %v1147 = vunpack.c.0.s8 %v1146
    %v1148 = vlaneseq
    %v1149 = vshrl.u32 %v1148, 7
    %v1150 = vsub.s32 %v1147, %v1149
    %v1151 = vrot.slane %v1141, %v1150
    %v1153 = vunpack.c.l.s4 1966171168
    %v1154 = vunpack.c.0.s8 %v1153
    %v1155 = vlaneseq
    %v1156 = vshrl.u32 %v1155, 7
    %v1157 = vsub.s32 %v1154, %v1156
    %v1158 = vrot.slane %v1142, %v1157
    %v1160 = vunpack.c.l.s4 1966171168
    %v1161 = vunpack.c.0.s8 %v1160
    %v1162 = vlaneseq
    %v1163 = vshrl.u32 %v1162, 7
    %v1164 = vsub.s32 %v1161, %v1163
    %v1165 = vrot.slane %v1143, %v1164
    %v1167 = vunpack.c.l.s4 1966171168
    %v1168 = vunpack.c.0.s8 %v1167
    %v1169 = vlaneseq
    %v1170 = vshrl.u32 %v1169, 7
    %v1171 = vsub.s32 %v1168, %v1170
    %v1172 = vrot.slane %v1144, %v1171
    %v1173 = vcombine.low %v1151, %v1158
    %v1174 = vcombine.low %v1165, %v1172
    %v1176 = vunpack.c.l.s4 1966171168
    %v1177 = vunpack.c.0.s8 %v1176
    %v1178 = vlaneseq
    %v1179 = vshrl.u32 %v1178, 7
    %v1180 = vsub.s32 %v1177, %v1179
    %v1181 = vrot.slane %v1173, %v1180
    %v1183 = vunpack.c.l.s4 1966171168
    %v1184 = vunpack.c.0.s8 %v1183
    %v1185 = vlaneseq
    %v1186 = vshrl.u32 %v1185, 7
    %v1187 = vsub.s32 %v1184, %v1186
    %v1188 = vrot.slane %v1174, %v1187
    %v1189 = vcombine.low %v1181, %v1188
    %v1190 = vcombine.low %v1117, %v1118
    %v1191 = vcombine.low %v1119, %v1120
    %v1192 = vcombine.low %v1121, %v1122
    %v1193 = vcombine.low %v1123, %v1124
    %v1195 = vunpack.c.l.s4 1966171168
    %v1196 = vunpack.c.0.s8 %v1195
    %v1197 = vlaneseq
    %v1198 = vshrl.u32 %v1197, 7
    %v1199 = vsub.s32 %v1196, %v1198
    %v1200 = vrot.slane %v1190, %v1199
    %v1202 = vunpack.c.l.s4 1966171168
    %v1203 = vunpack.c.0.s8 %v1202
    %v1204 = vlaneseq
    %v1205 = vshrl.u32 %v1204, 7
    %v1206 = vsub.s32 %v1203, %v1205
    %v1207 = vrot.slane %v1191, %v1206
    %v1209 = vunpack.c.l.s4 1966171168
    %v1210 = vunpack.c.0.s8 %v1209
    %v1211 = vlaneseq
    %v1212 = vshrl.u32 %v1211, 7
    %v1213 = vsub.s32 %v1210, %v1212
    %v1214 = vrot.slane %v1192, %v1213
    %v1216 = vunpack.c.l.s4 1966171168
    %v1217 = vunpack.c.0.s8 %v1216
    %v1218 = vlaneseq
    %v1219 = vshrl.u32 %v1218, 7
    %v1220 = vsub.s32 %v1217, %v1219
    %v1221 = vrot.slane %v1193, %v1220
    %v1222 = vcombine.low %v1200, %v1207
    %v1223 = vcombine.low %v1214, %v1221
    %v1225 = vunpack.c.l.s4 1966171168
    %v1226 = vunpack.c.0.s8 %v1225
    %v1227 = vlaneseq
    %v1228 = vshrl.u32 %v1227, 7
    %v1229 = vsub.s32 %v1226, %v1228
    %v1230 = vrot.slane %v1222, %v1229
    %v1232 = vunpack.c.l.s4 1966171168
    %v1233 = vunpack.c.0.s8 %v1232
    %v1234 = vlaneseq
    %v1235 = vshrl.u32 %v1234, 7
    %v1236 = vsub.s32 %v1233, %v1235
    %v1237 = vrot.slane %v1223, %v1236
    %v1238 = vcombine.low %v1230, %v1237
    %v1241 = vmul.f32 %v621, %v1189
    %v1242 = vmul.f32 %v622, %v1189
    %v1243 = vmul.f32 %v623, %v1189
    %v1244 = vmul.f32 %v624, %v1189
    %v1245 = vmul.f32 %v625, %v1238
    %v1246 = vmul.f32 %v626, %v1238
    %v1247 = vmul.f32 %v627, %v1238
    %v1248 = vmul.f32 %v628, %v1238
    %v1249 = vld [vmem:[#allocation2] sm:$0x1]
    %v1250 = vld [vmem:[#allocation2 + $0x1] sm:$0x1]
    %v1251 = vld [vmem:[#allocation2 + $0x2] sm:$0x1]
    %v1252 = vld [vmem:[#allocation2 + $0x3] sm:$0x1]
    %1254 = vset.pattern.permute.xlu0 0
    %1255 = vperm.xlu0 %1254, %v1249
    %v1256 = vpop.permute.xlu0 %1255
    %v1258 = vlaneseq
    %v1259 = vshrl.u32 %v1258, 7
    %v1260 = vsub.s32 0, %v1259
    %v1261 = vrot.slane %v1256, %v1260
    %1263 = vset.pattern.permute.xlu0 0
    %1264 = vperm.xlu0 %1263, %v1250
    %v1265 = vpop.permute.xlu0 %1264
    %v1267 = vlaneseq
    %v1268 = vshrl.u32 %v1267, 7
    %v1269 = vsub.s32 0, %v1268
    %v1270 = vrot.slane %v1265, %v1269
    %1272 = vset.pattern.permute.xlu0 0
    %1273 = vperm.xlu0 %1272, %v1251
    %v1274 = vpop.permute.xlu0 %1273
    %v1276 = vlaneseq
    %v1277 = vshrl.u32 %v1276, 7
    %v1278 = vsub.s32 0, %v1277
    %v1279 = vrot.slane %v1274, %v1278
    %1281 = vset.pattern.permute.xlu0 0
    %1282 = vperm.xlu0 %1281, %v1252
    %v1283 = vpop.permute.xlu0 %1282
    %v1285 = vlaneseq
    %v1286 = vshrl.u32 %v1285, 7
    %v1287 = vsub.s32 0, %v1286
    %v1288 = vrot.slane %v1283, %v1287
    %v1289 = vmul.f32 %v1241, %v1261
    %v1290 = vmul.f32 %v1242, %v1270
    %v1291 = vmul.f32 %v1243, %v1279
    %v1292 = vmul.f32 %v1244, %v1288
    %v1293 = vmul.f32 %v1245, %v1261
    %v1294 = vmul.f32 %v1246, %v1270
    %v1295 = vmul.f32 %v1247, %v1279
    %v1296 = vmul.f32 %v1248, %v1288
    %1297 = vst [vmem:[#allocation7] sm:$0xff] %v1289
    %1298 = vst [vmem:[#allocation7 + $0x8] sm:$0xff] %v1290
    %1299 = vst [vmem:[#allocation7 + $0x10] sm:$0xff] %v1291
    %1300 = vst [vmem:[#allocation7 + $0x18] sm:$0xff] %v1292
    %1301 = vst [vmem:[#allocation7 + $0x20] sm:$0xff] %v1293
    %1302 = vst [vmem:[#allocation7 + $0x28] sm:$0xff] %v1294
    %1303 = vst [vmem:[#allocation7 + $0x30] sm:$0xff] %v1295
    %1304 = vst [vmem:[#allocation7 + $0x38] sm:$0xff] %v1296
    // Predicated region
    $region18: #{tpu_custom_call.1} parent=1 // pred_check
      _
    $region19: #{tpu_custom_call.1} parent=1 // pred_check_branch
      %1306 = sbr.rel (0) target = $region21
    $region20: #{tpu_custom_call.1} parent=1 // pred_region
      %s1308 = ssub.s32 1024, 1024
      %1309 = vsyncadd [#allocation4], %s1308
      %s1310 = sshll.u32 [#allocation7], 4
      %s1311 = int_to_ptr.vmem [resolvable:$true] %s1310
      %1316 = dma.vmem_to_hbm [thread:$0]  %s1311, 1024, %s2, [#allocation4], 128, 128, 8
    $region21: #{tpu_custom_call.1} parent=1 // pred_fallthru
      _
    // Predicated region
    $region22: #{tpu_custom_call.1} parent=1 // pred_check
      _
    $region23: #{tpu_custom_call.1} parent=1 // pred_check_branch
      %1318 = sbr.rel (0) target = $region25
    $region24: #{tpu_custom_call.1} parent=1 // pred_region
      %1319 = dma.done [#allocation4], 1024
    $region25: #{tpu_custom_call.1} parent=1 // pred_fallthru
      _
    %1320 = vsyncpa [#allocation3], 1
    %1321 = vsyncpa [#allocation6], 1
    %1322 = vsyncpa [#allocation4], 1

</llo_original>
